<compile_context>
chip_gen: v6e
topology: v6e:2x2x1
jax: 0.10.0
libtpu: 0.0.40
codegen_flags: <defaults>
</compile_context>

<pallas_src>
import functools

import jax
import jax.numpy as jnp
from jax.experimental import pallas as pl
from jax.experimental.pallas import tpu as pltpu


TEMPERATURE = 0.07
_EPS = 1e-12  # F.normalize default eps


def _round_up(x, m):
    return ((x + m - 1) // m) * m


def _l2_normalize_rows(x):
    """x / max(||x||_2, eps) over axis=1, computed in f32, cast back."""
    x32 = x.astype(jnp.float32)
    n = jnp.sqrt(jnp.sum(x32 * x32, axis=1, keepdims=True))
    return (x32 / jnp.maximum(n, jnp.float32(_EPS))).astype(x.dtype)


def _tpu_params():
    """(vmem budget in bytes, number of TensorCores), conservative fallbacks."""
    vmem_physical = 64 * 1024 * 1024  # v7x per-core VMEM (smallest of the line)
    num_cores = 1
    try:
        info = pltpu.get_tpu_info()
        vmem_physical = int(getattr(info, "vmem_capacity_bytes", vmem_physical))
    except Exception:
        pass
    try:
        d = jax.devices()[0]
        num_cores = int(getattr(d, "num_cores", 0) or 0)
        if num_cores <= 0:
            kind = str(getattr(d, "device_kind", "")).lower()
            num_cores = 2 if ("v7" in kind or "7x" in kind) else 1
    except Exception:
        num_cores = 1
    # Leave headroom below physical VMEM (v5e/v6e 128 MiB -> ~96 MiB,
    # v7x 64 MiB -> 48 MiB, unknown -> 48 MiB).
    vmem_budget = (vmem_physical * 3) // 4
    return vmem_budget, num_cores


def _select_tiles(B, C, D, itemsize, vmem_budget, num_cores):
    """Largest (TB, TC) that fits the VMEM budget and shards across cores."""
    B8 = _round_up(B, 8)
    tb = min(1024, B8)
    tc = min(1024, _round_up(C, 128))

    # v7x: the 'parallel' batch grid axis is the only cross-TensorCore
    # sharding mechanism, so keep at least num_cores batch tiles if possible.
    while num_cores > 1 and tb > 8 and pl.cdiv(B8, tb) < num_cores:
        tb = max(8, tb // 2)

    def fits(tb_, tc_):
        cols_buf = 3 * D * tc_ * itemsize        # cols tile (up to 3 buffers)
        q_buf = 2 * tb_ * D * itemsize           # q tile (double buffered)
        qs = tb_ * D * itemsize                  # normalized-q scratch
        temps = 3 * tb_ * tc_ * 4                # logits / exp temporaries
        misc = 4 * tb_ * 4 + (2 << 20)           # accumulators + headroom
        return cols_buf + q_buf + qs + temps + misc <= vmem_budget

    while not fits(tb, tc):
        if tc > 128 and tc >= tb:
            tc //= 2
        elif tb > 8:
            tb //= 2
        elif tc > 128:
            tc //= 2
        else:
            break
    return tb, tc


def _infonce_kernel(q_ref, cols_ref, out_ref,
                    qs_ref, m_ref, s_ref, t_ref,
                    *, c_total, inv_t, need_col_mask):
    """One (batch_tile, column_tile) step of the online-logsumexp loss."""
    j = pl.program_id(1)
    n_j = pl.num_programs(1)

    # --- per-batch-tile init (first column step) --------------------------
    @pl.when(j == 0)
    def _init():
        q = q_ref[...].astype(jnp.float32)                       # (TB, D)
        sumsq = jnp.sum(q * q, axis=1, keepdims=True)            # (TB, 1)
        inv_norm = jax.lax.rsqrt(jnp.maximum(sumsq, jnp.float32(_EPS * _EPS)))
        # Normalize q once per batch tile; keep the matmul operand in the
        # input dtype (bf16 stays bf16) for full MXU throughput.
        qs_ref[...] = (q * inv_norm).astype(qs_ref.dtype)
        m_ref[...] = jnp.full(m_ref.shape, -jnp.inf, dtype=jnp.float32)
        s_ref[...] = jnp.zeros(s_ref.shape, dtype=jnp.float32)

    # --- this column tile --------------------------------------------------
    # cols are pre-normalized in the wrapper: no per-tile norms, no col scale.
    # 1/temperature is applied in f32 AFTER the matmul (precision-safe).
    logits = jnp.dot(qs_ref[...], cols_ref[...],
                     preferred_element_type=jnp.float32) * jnp.float32(inv_t)

    if need_col_mask:  # static: only emitted when B+N was padded up
        tc = logits.shape[1]
        col_ids = j * tc + jax.lax.broadcasted_iota(jnp.int32, (1, tc), 1)
        logits = jnp.where(col_ids < c_total, logits, -jnp.inf)

    # Target = column 0 of the concatenated logits (labels are all zeros).
    @pl.when(j == 0)
    def _capture_target():
        t_ref[...] = logits[:, 0:1]

    # Online logsumexp update.
    m_prev = m_ref[...]
    m_new = jnp.maximum(m_prev, jnp.max(logits, axis=1, keepdims=True))
    alpha = jnp.exp(m_prev - m_new)
    s_ref[...] = alpha * s_ref[...] + jnp.sum(jnp.exp(logits - m_new),
                                              axis=1, keepdims=True)
    m_ref[...] = m_new

    # --- finalize on the last column step ----------------------------------
    @pl.when(j == n_j - 1)
    def _finalize():
        lse = m_ref[...] + jnp.log(s_ref[...])
        out_ref[...] = lse - t_ref[...]


def infonce_loss(q, k, neg, temperature=TEMPERATURE, *, max_tb=None, max_tc=None):
    """q: (B, D), k: (B, D), neg: (N, D) -> scalar f32 InfoNCE loss."""
    B, D = q.shape
    N = neg.shape[0]
    C = B + N

    # Lane-dense, fully normalized column operand [k | neg]^T of shape (D, C);
    # the normalize fuses with the concat/transpose that materializes it.
    cols = jnp.concatenate([_l2_normalize_rows(k), _l2_normalize_rows(neg)],
                           axis=0).T                              # (D, C)

    itemsize = jnp.dtype(q.dtype).itemsize
    vmem_budget, num_cores = _tpu_params()
    TB, TC = _select_tiles(B, C, D, itemsize, vmem_budget, num_cores)
    if max_tb is not None:
        TB = min(TB, max(8, _round_up(max_tb, 8)))
    if max_tc is not None:
        TC = min(TC, max(128, _round_up(max_tc, 128)))

    B_pad = _round_up(B, TB)
    C_pad = _round_up(C, TC)

    if B_pad != B:
        q = jnp.pad(q, ((0, B_pad - B), (0, 0)))
    if C_pad != C:
        cols = jnp.pad(cols, ((0, 0), (0, C_pad - C)))

    nb = B_pad // TB
    nc = C_pad // TC

    kernel = functools.partial(
        _infonce_kernel,
        c_total=C,
        inv_t=1.0 / temperature,
        need_col_mask=(C_pad != C),
    )

    # Triple-buffer the cols stream when D is small and there are several
    # column tiles (hides the exposed cols DMA on low-bandwidth parts).
    cols_spec_kwargs = {}
    if D <= 256 and nc >= 3:
        cols_spec_kwargs["pipeline_mode"] = pl.Buffered(3)
    cols_spec = pl.BlockSpec((D, TC), lambda i, j: (0, j), **cols_spec_kwargs)

    per_row = pl.pallas_call(
        kernel,
        out_shape=jax.ShapeDtypeStruct((B_pad, 1), jnp.float32),
        grid_spec=pltpu.PrefetchScalarGridSpec(
            num_scalar_prefetch=0,
            grid=(nb, nc),
            in_specs=[
                pl.BlockSpec((TB, D), lambda i, j: (i, 0)),      # q batch tile
                cols_spec,                                       # column tile
            ],
            out_specs=pl.BlockSpec((TB, 1), lambda i, j: (i, 0)),
            scratch_shapes=[
                pltpu.VMEM((TB, D), q.dtype),      # normalized q tile
                pltpu.VMEM((TB, 1), jnp.float32),  # running max
                pltpu.VMEM((TB, 1), jnp.float32),  # running sumexp
                pltpu.VMEM((TB, 1), jnp.float32),  # target logit (column 0)
            ],
        ),
        compiler_params=pltpu.CompilerParams(
            dimension_semantics=("parallel", "arbitrary"),
            vmem_limit_bytes=int(vmem_budget),
        ),
        cost_estimate=pl.CostEstimate(
            flops=2 * B_pad * C_pad * D,
            transcendentals=B_pad * C_pad,
            # cols is re-streamed once per batch tile.
            bytes_accessed=int(nb) * int(cols.nbytes) + int(q.nbytes) + B_pad * 4,
        ),
    )(q, cols)

    # Per-row losses from the kernel, mean (over real rows) in the wrapper.
    return jnp.mean(per_row[:B, 0])


def _infonce_ref(q, k, neg, temperature=TEMPERATURE):
    """Pure-JAX reference mirroring the PyTorch forward exactly."""
    def _norm(x):
        n = jnp.sqrt(jnp.sum(x * x, axis=1, keepdims=True))
        return x / jnp.maximum(n, _EPS)

    qn, kn, nn_ = _norm(q), _norm(k), _norm(neg)
    l_pos = qn @ kn.T / temperature
    l_neg = qn @ nn_.T / temperature
    logits = jnp.concatenate([l_pos, l_neg], axis=1)
    lse = jax.scipy.special.logsumexp(logits, axis=1)
    return jnp.mean(lse - logits[:, 0])


if __name__ == "__main__":
    key = jax.random.PRNGKey(0)
    kq, kk, kn = jax.random.split(key, 3)

    # Test 1: small, single-tile path.
    B, D, N = 8, 32, 16
    q = jax.random.normal(kq, (B, D), dtype=jnp.float32)
    k = jax.random.normal(kk, (B, D), dtype=jnp.float32)
    neg = jax.random.normal(kn, (N, D), dtype=jnp.float32)

    loss = jax.block_until_ready(infonce_loss(q, k, neg))
    ref = jax.block_until_ready(_infonce_ref(q, k, neg))
    assert jnp.allclose(loss, ref, rtol=1e-4, atol=1e-4), (loss, ref)

    # Test 2: multi-tile path (batch padding, column masking, online LSE over
    # several column tiles, triple-buffered cols stream).
    B2, D2, N2 = 12, 48, 300
    q2 = jax.random.normal(kq, (B2, D2), dtype=jnp.float32)
    k2 = jax.random.normal(kk, (B2, D2), dtype=jnp.float32)
    neg2 = jax.random.normal(kn, (N2, D2), dtype=jnp.float32)

    loss2 = jax.block_until_ready(infonce_loss(q2, k2, neg2, max_tb=8, max_tc=128))
    ref2 = jax.block_until_ready(_infonce_ref(q2, k2, neg2))
    assert jnp.allclose(loss2, ref2, rtol=1e-4, atol=1e-4), (loss2, ref2)

    print("KERNEL_OK")
</pallas_src>

<mosaic_0001>
module attributes {stable_mosaic.version = 11 : i64} {
  func.func @_infonce_kernel(%arg0: i32, %arg1: i32, %arg2: memref<8x32xf32, #tpu.memory_space<vmem>>, %arg3: memref<32x128xf32, #tpu.memory_space<vmem>>, %arg4: memref<8x1xf32, #tpu.memory_space<vmem>>, %arg5: memref<8x32xf32, #tpu.memory_space<vmem>>, %arg6: memref<8x1xf32, #tpu.memory_space<vmem>>, %arg7: memref<8x1xf32, #tpu.memory_space<vmem>>, %arg8: memref<8x1xf32, #tpu.memory_space<vmem>>) attributes {dimension_semantics = [#tpu.dimension_semantics<parallel>, #tpu.dimension_semantics<arbitrary>], iteration_bounds = array<i64: 1, 1>, scalar_prefetch = 0 : i64, scratch_operands = 4 : i64, tpu.core_type = #tpu.core_type<tc>, window_params = [{transform_indices = @transform_0, window_bounds = array<i64: 8, 32>}, {transform_indices = @transform_1, window_bounds = array<i64: 32, 128>}, {transform_indices = @transform_2, window_bounds = array<i64: 8, 1>}]} {
    %c0_i32 = arith.constant 0 : i32
    %0 = arith.cmpi eq, %arg1, %c0_i32 : i32
    %1 = arith.extui %0 : i1 to i32
    %c0_i32_0 = arith.constant 0 : i32
    %2 = arith.cmpi ne, %1, %c0_i32_0 : i32
    scf.if %2 {
      %c0_20 = arith.constant 0 : index
      %c0_21 = arith.constant 0 : index
      %40 = vector.load %arg2[%c0_20, %c0_21] : memref<8x32xf32, #tpu.memory_space<vmem>>, vector<8x32xf32>
      %41 = arith.mulf %40, %40 : vector<8x32xf32>
      %cst_22 = arith.constant dense<0.000000e+00> : vector<8xf32>
      %42 = vector.multi_reduction <add>, %41, %cst_22 [1] : vector<8x32xf32> to vector<8xf32>
      %43 = vector.shape_cast %42 : vector<8xf32> to vector<8x1xf32>
      %cst_23 = arith.constant 1.000000e-24 : f32
      %44 = vector.broadcast %cst_23 : f32 to vector<8x1xf32>
      %45 = arith.maximumf %43, %44 : vector<8x1xf32>
      %46 = math.rsqrt %45 : vector<8x1xf32>
      %47 = vector.broadcast %46 : vector<8x1xf32> to vector<8x32xf32>
      %48 = arith.mulf %40, %47 : vector<8x32xf32>
      %c0_24 = arith.constant 0 : index
      %c0_25 = arith.constant 0 : index
      %49 = vector.load %arg5[%c0_24, %c0_25] : memref<8x32xf32, #tpu.memory_space<vmem>>, vector<8x32xf32>
      tpu.vector_store %arg5[%c0_24, %c0_25], %48 {strides = array<i32>} : memref<8x32xf32, #tpu.memory_space<vmem>>, vector<8x32xf32>,
      %cst_26 = arith.constant 0xFF800000 : f32
      %50 = vector.broadcast %cst_26 : f32 to vector<8x1xf32>
      %c0_27 = arith.constant 0 : index
      %c0_28 = arith.constant 0 : index
      %51 = vector.load %arg6[%c0_27, %c0_28] : memref<8x1xf32, #tpu.memory_space<vmem>>, vector<8x1xf32>
      tpu.vector_store %arg6[%c0_27, %c0_28], %50 {strides = array<i32>} : memref<8x1xf32, #tpu.memory_space<vmem>>, vector<8x1xf32>,
      %cst_29 = arith.constant 0.000000e+00 : f32
      %52 = vector.broadcast %cst_29 : f32 to vector<8x1xf32>
      %c0_30 = arith.constant 0 : index
      %c0_31 = arith.constant 0 : index
      %53 = vector.load %arg7[%c0_30, %c0_31] : memref<8x1xf32, #tpu.memory_space<vmem>>, vector<8x1xf32>
      tpu.vector_store %arg7[%c0_30, %c0_31], %52 {strides = array<i32>} : memref<8x1xf32, #tpu.memory_space<vmem>>, vector<8x1xf32>,
    } else {
    }
    %c0 = arith.constant 0 : index
    %c0_1 = arith.constant 0 : index
    %3 = vector.load %arg5[%c0, %c0_1] : memref<8x32xf32, #tpu.memory_space<vmem>>, vector<8x32xf32>
    %c0_2 = arith.constant 0 : index
    %c0_3 = arith.constant 0 : index
    %4 = vector.load %arg3[%c0_2, %c0_3] : memref<32x128xf32, #tpu.memory_space<vmem>>, vector<32x128xf32>
    %cst = arith.constant dense<0.000000e+00> : vector<8x128xf32>
    %5 = tpu.matmul %3, %4, %cst {dimension_numbers = #tpu.dot_dimension_numbers<[1], [0], [0], [1], [0, 0, 1, 1], [], []>} : vector<8x32xf32>, vector<32x128xf32>, vector<8x128xf32> -> vector<8x128xf32>
    %cst_4 = arith.constant 14.2857141 : f32
    %6 = vector.broadcast %cst_4 : f32 to vector<8x128xf32>
    %7 = arith.mulf %5, %6 : vector<8x128xf32>
    %c128_i32 = arith.constant 128 : i32
    %8 = arith.muli %arg1, %c128_i32 : i32
    %9 = tpu.iota {dimensions = array<i32: 1>} : vector<1x128xi32>
    %10 = vector.broadcast %8 : i32 to vector<1x128xi32>
    %11 = arith.addi %10, %9 : vector<1x128xi32>
    %c24_i32 = arith.constant 24 : i32
    %12 = vector.broadcast %c24_i32 : i32 to vector<1x128xi32>
    %13 = arith.cmpi slt, %11, %12 : vector<1x128xi32>
    %cst_5 = arith.constant 0xFF800000 : f32
    %14 = vector.shape_cast %13 : vector<1x128xi1> to vector<1x128xi1>
    %15 = vector.broadcast %14 : vector<1x128xi1> to vector<8x128xi1>
    %16 = vector.broadcast %cst_5 : f32 to vector<8x128xf32>
    %17 = arith.select %15, %7, %16 : vector<8x128xi1>, vector<8x128xf32>
    %c0_i32_6 = arith.constant 0 : i32
    %18 = arith.cmpi eq, %arg1, %c0_i32_6 : i32
    %19 = arith.extui %18 : i1 to i32
    %c0_i32_7 = arith.constant 0 : i32
    %20 = arith.cmpi ne, %19, %c0_i32_7 : i32
    scf.if %20 {
      %40 = vector.extract_strided_slice %17 {offsets = [0, 0], sizes = [8, 1], strides = [1, 1]} : vector<8x128xf32> to vector<8x1xf32>
      %c0_20 = arith.constant 0 : index
      %c0_21 = arith.constant 0 : index
      %41 = vector.load %arg8[%c0_20, %c0_21] : memref<8x1xf32, #tpu.memory_space<vmem>>, vector<8x1xf32>
      tpu.vector_store %arg8[%c0_20, %c0_21], %40 {strides = array<i32>} : memref<8x1xf32, #tpu.memory_space<vmem>>, vector<8x1xf32>,
    } else {
    }
    %c0_8 = arith.constant 0 : index
    %c0_9 = arith.constant 0 : index
    %21 = vector.load %arg6[%c0_8, %c0_9] : memref<8x1xf32, #tpu.memory_space<vmem>>, vector<8x1xf32>
    %cst_10 = arith.constant dense<0xFF800000> : vector<8xf32>
    %22 = vector.multi_reduction <maximumf>, %17, %cst_10 [1] : vector<8x128xf32> to vector<8xf32>
    %23 = vector.shape_cast %22 : vector<8xf32> to vector<8x1xf32>
    %24 = arith.maximumf %21, %23 : vector<8x1xf32>
    %25 = arith.subf %21, %24 : vector<8x1xf32>
    %26 = math.exp %25 : vector<8x1xf32>
    %c0_11 = arith.constant 0 : index
    %c0_12 = arith.constant 0 : index
    %27 = vector.load %arg7[%c0_11, %c0_12] : memref<8x1xf32, #tpu.memory_space<vmem>>, vector<8x1xf32>
    %28 = arith.mulf %26, %27 : vector<8x1xf32>
    %29 = vector.broadcast %24 : vector<8x1xf32> to vector<8x128xf32>
    %30 = arith.subf %17, %29 : vector<8x128xf32>
    %31 = math.exp %30 : vector<8x128xf32>
    %cst_13 = arith.constant dense<0.000000e+00> : vector<8xf32>
    %32 = vector.multi_reduction <add>, %31, %cst_13 [1] : vector<8x128xf32> to vector<8xf32>
    %33 = vector.shape_cast %32 : vector<8xf32> to vector<8x1xf32>
    %34 = arith.addf %28, %33 : vector<8x1xf32>
    %c0_14 = arith.constant 0 : index
    %c0_15 = arith.constant 0 : index
    %35 = vector.load %arg7[%c0_14, %c0_15] : memref<8x1xf32, #tpu.memory_space<vmem>>, vector<8x1xf32>
    tpu.vector_store %arg7[%c0_14, %c0_15], %34 {strides = array<i32>} : memref<8x1xf32, #tpu.memory_space<vmem>>, vector<8x1xf32>,
    %c0_16 = arith.constant 0 : index
    %c0_17 = arith.constant 0 : index
    %36 = vector.load %arg6[%c0_16, %c0_17] : memref<8x1xf32, #tpu.memory_space<vmem>>, vector<8x1xf32>
    tpu.vector_store %arg6[%c0_16, %c0_17], %24 {strides = array<i32>} : memref<8x1xf32, #tpu.memory_space<vmem>>, vector<8x1xf32>,
    %c0_i32_18 = arith.constant 0 : i32
    %37 = arith.cmpi eq, %arg1, %c0_i32_18 : i32
    %38 = arith.extui %37 : i1 to i32
    %c0_i32_19 = arith.constant 0 : i32
    %39 = arith.cmpi ne, %38, %c0_i32_19 : i32
    scf.if %39 {
      %c0_20 = arith.constant 0 : index
      %c0_21 = arith.constant 0 : index
      %40 = vector.load %arg6[%c0_20, %c0_21] : memref<8x1xf32, #tpu.memory_space<vmem>>, vector<8x1xf32>
      %c0_22 = arith.constant 0 : index
      %c0_23 = arith.constant 0 : index
      %41 = vector.load %arg7[%c0_22, %c0_23] : memref<8x1xf32, #tpu.memory_space<vmem>>, vector<8x1xf32>
      %42 = math.log %41 : vector<8x1xf32>
      %43 = arith.addf %40, %42 : vector<8x1xf32>
      %c0_24 = arith.constant 0 : index
      %c0_25 = arith.constant 0 : index
      %44 = vector.load %arg8[%c0_24, %c0_25] : memref<8x1xf32, #tpu.memory_space<vmem>>, vector<8x1xf32>
      %45 = arith.subf %43, %44 : vector<8x1xf32>
      %c0_26 = arith.constant 0 : index
      %c0_27 = arith.constant 0 : index
      %46 = vector.load %arg4[%c0_26, %c0_27] : memref<8x1xf32, #tpu.memory_space<vmem>>, vector<8x1xf32>
      tpu.vector_store %arg4[%c0_26, %c0_27], %45 {strides = array<i32>} : memref<8x1xf32, #tpu.memory_space<vmem>>, vector<8x1xf32>,
    } else {
    }
    return
  }
  func.func @transform_0(%arg0: i32, %arg1: i32) -> (i32, i32) {
    %c0_i32 = arith.constant 0 : i32
    %c0_i32_0 = arith.constant 0 : i32
    return %arg0, %c0_i32 : i32, i32
  }
  func.func @transform_1(%arg0: i32, %arg1: i32) -> (i32, i32) {
    %c0_i32 = arith.constant 0 : i32
    %c0_i32_0 = arith.constant 0 : i32
    return %c0_i32, %arg1 : i32, i32
  }
  func.func @transform_2(%arg0: i32, %arg1: i32) -> (i32, i32) {
    %c0_i32 = arith.constant 0 : i32
    %c0_i32_0 = arith.constant 0 : i32
    return %arg0, %c0_i32 : i32, i32
  }
}

</mosaic_0001>

<llo_original>
// kernel: tpu_custom_call.1
$region0: #{tpu_custom_call.1}
  #allocation0 [shape = 'u32[]', space=smem, size = 0x4, offset = 0x4, fixed_abs, tag = 'smem constant byte address 0x4 - core index']
  #allocation1 [shape = 'u32[144,128]{1,0:T(1,128)}', space=vmem, size = 0x12000, scoped, tag = 'internal scratch']
  #allocation2 [shape = 'f32[8,32]{1,0:T(8,128)}', space=vmem, size = 0x1000, scoped, tag = 'scratch operand']
  #allocation3 [shape = 'f32[8,1]{1,0:T(8,128)}', space=vmem, size = 0x1000, scoped, tag = 'scratch operand']
  #allocation4 [shape = 'f32[8,1]{1,0:T(8,128)}', space=vmem, size = 0x1000, scoped, tag = 'scratch operand']
  #allocation5 [shape = 'f32[8,1]{1,0:T(8,128)}', space=vmem, size = 0x1000, scoped, tag = 'scratch operand']
  %s0 = inlined_call_operand.hbm [shape: f32[8,32], index: 0, kind: input, shape index: {}]
  %s1 = inlined_call_operand.hbm [shape: f32[32,128], index: 1, kind: input, shape index: {}]
  %s2 = inlined_call_operand.vmem [shape: f32[8,1], index: 2, kind: output, shape index: {}]
  %s3 = sld [smem:[#allocation0]]
  $region38: #{tpu_custom_call.1} parent=0
    _
  %s5 = ssub.s32 1, %s3
  %s6 = scalar_select 0, %s5, %s3
  $region1: #{tpu_custom_call.1} parent=0
    #allocation6 [shape = 'u8[4096]{0}', space=vmem, size = 0x1000, scoped, tag = 'input window, operand 0, single buffered']
    #allocation7 [shape = 's32[1]{0}', space=sflag, size = 0x4, scoped, tag = 'scoped memory for tpu_custom_call.1']
    #allocation8 [shape = 'u8[16384]{0}', space=vmem, size = 0x4000, scoped, tag = 'input window, operand 1, single buffered']
    #allocation9 [shape = 's32[1]{0}', space=sflag, size = 0x4, scoped, tag = 'scoped memory for tpu_custom_call.1']
    %7 = vsyncpa [#allocation7], 0
    %8 = vsyncpa [#allocation9], 0
    // Predicated region
    $region2: #{tpu_custom_call.1} parent=1 // pred_check
      _
    $region3: #{tpu_custom_call.1} parent=1 // pred_check_branch
      %10 = sbr.rel (0) target = $region5
    $region4: #{tpu_custom_call.1} parent=1 // pred_region
      %s12 = ssub.s32 128, 128
      %13 = vsyncadd [#allocation7], %s12
      %s15 = sshll.u32 [#allocation6], 4
      %s16 = int_to_ptr.vmem [resolvable:$true] %s15
      %18 = dma.hbm_to_vmem [thread:$0]  %s0, 128, %s16, [#allocation7]
    $region5: #{tpu_custom_call.1} parent=1 // pred_fallthru
      _
    // Predicated region
    $region6: #{tpu_custom_call.1} parent=1 // pred_check
      _
    $region7: #{tpu_custom_call.1} parent=1 // pred_check_branch
      %20 = sbr.rel (0) target = $region9
    $region8: #{tpu_custom_call.1} parent=1 // pred_region
      %s22 = ssub.s32 512, 512
      %23 = vsyncadd [#allocation9], %s22
      %s24 = sshll.u32 [#allocation8], 4
      %s25 = int_to_ptr.vmem [resolvable:$true] %s24
      %30 = dma.hbm_to_vmem [thread:$0]  %s1, 512, %s25, [#allocation9], 128, 128, 8
    $region9: #{tpu_custom_call.1} parent=1 // pred_fallthru
      _
    // Predicated region
    $region10: #{tpu_custom_call.1} parent=1 // pred_check
      _
    $region11: #{tpu_custom_call.1} parent=1 // pred_check_branch
      %32 = sbr.rel (0) target = $region13
    $region12: #{tpu_custom_call.1} parent=1 // pred_region
      %33 = dma.done [#allocation7], 128
    $region13: #{tpu_custom_call.1} parent=1 // pred_fallthru
      _
    // Predicated region
    $region14: #{tpu_custom_call.1} parent=1 // pred_check
      _
    $region15: #{tpu_custom_call.1} parent=1 // pred_check_branch
      %35 = sbr.rel (0) target = $region17
    $region16: #{tpu_custom_call.1} parent=1 // pred_region
      %36 = dma.done [#allocation9], 512
    $region17: #{tpu_custom_call.1} parent=1 // pred_fallthru
      _
    %p37 = scmp.eq.s32.totalorder 0, 0
    // Predicated region
    $region18: #{tpu_custom_call.1} parent=1 // pred_check
      %p38 = pneg %p37
    $region19: #{tpu_custom_call.1} parent=1 // pred_check_branch
      %40 = sbr.rel (%p38) target = $region21
    $region20: #{tpu_custom_call.1} parent=1 // pred_region
      %v41 = vld [vmem:[#allocation6] sm:$0xff]
      %v42 = vmul.f32 %v41, %v41
      %vm43 = vcmask 261120
      %v44 = vsel %vm43, %v42, 0.0
      %45 = vadd.xlane.f32.xlu0 %v44
      %v46 = vpop.xlane.xlu0 %45
      %v47 = vmax.f32 %v46, 1e-24
      %v48 = vrsqrt.pop %v47
      %v49 = vmul.f32 %v41, %v48
      %50 = vst.msk [vmem:[#allocation2] sm:$0xff] %vm43, %v49
      %vm51 = vcmask 7168
      %52 = vst.msk [vmem:[#allocation3] sm:$0xff] %vm51, -inf
      %53 = vst.msk [vmem:[#allocation4] sm:$0xff] %vm51, 0.0
    $region21: #{tpu_custom_call.1} parent=1 // pred_fallthru
      _
    %v54 = vld [vmem:[#allocation2] sm:$0xff]
    %v55 = vld [vmem:[#allocation8] sm:$0xff]
    %v56 = vld [vmem:[#allocation8 + $0x8] sm:$0xff]
    %v57 = vld [vmem:[#allocation8 + $0x10] sm:$0xff]
    %v58 = vld [vmem:[#allocation8 + $0x18] sm:$0xff]
    %vm59 = vcmask 261120
    %v61 = vsel %vm59, %v54, 0
    %63 = vmatprep.subr.mxu0 0.0
    %64 = vmatpush1.msra.mxu0 0.0
    %65 = vmatprep.subr.mxu0 0.0
    %66 = vmatpush1.msra.mxu0 0.0
    %67 = vmatprep.subr.mxu0 0.0
    %68 = vmatpush1.msra.mxu0 0.0
    %69 = vmatprep.subr.mxu0 0.0
    %70 = vmatpush1.msra.mxu0 0.0
    %71 = vmatprep.subr.mxu0 0.0
    %72 = vmatpush1.msra.mxu0 0.0
    %73 = vmatprep.subr.mxu0 0.0
    %74 = vmatpush1.msra.mxu0 0.0
    %75 = vmatprep.subr.mxu0 0.0
    %76 = vmatpush1.msra.mxu0 0.0
    %77 = vmatprep.subr.mxu0 0.0
    %78 = vmatpush1.msra.mxu0 0.0
    %79 = vmatprep.subr.mxu0 0.0
    %80 = vmatpush1.msra.mxu0 0.0
    %81 = vmatprep.subr.mxu0 0.0
    %82 = vmatpush1.msra.mxu0 0.0
    %83 = vmatprep.subr.mxu0 0.0
    %84 = vmatpush1.msra.mxu0 0.0
    %85 = vmatprep.subr.mxu0 0.0
    %86 = vmatpush1.msra.mxu0 0.0
    %87 = vmatprep.subr.mxu0 0.0
    %88 = vmatpush1.msra.mxu0 %v58
    %89 = vmatprep.subr.mxu0 0.0
    %90 = vmatpush1.msra.mxu0 %v57
    %91 = vmatprep.subr.mxu0 0.0
    %92 = vmatpush1.msra.mxu0 %v56
    %93 = vmatprep.subr.mxu0 0.0
    %94 = vmatpush1.msra.mxu0 %v55
    %95 = vmatprep.subr.mxu0 0.0
    %96 = vmatpush2.msra.mxu0 0.0
    %97 = vmatprep.subr.mxu0 0.0
    %98 = vmatpush2.msra.mxu0 0.0
    %99 = vmatprep.subr.mxu0 0.0
    %100 = vmatpush2.msra.mxu0 0.0
    %101 = vmatprep.subr.mxu0 0.0
    %102 = vmatpush2.msra.mxu0 0.0
    %103 = vmatprep.subr.mxu0 0.0
    %104 = vmatpush2.msra.mxu0 0.0
    %105 = vmatprep.subr.mxu0 0.0
    %106 = vmatpush2.msra.mxu0 0.0
    %107 = vmatprep.subr.mxu0 0.0
    %108 = vmatpush2.msra.mxu0 0.0
    %109 = vmatprep.subr.mxu0 0.0
    %110 = vmatpush2.msra.mxu0 0.0
    %111 = vmatprep.subr.mxu0 0.0
    %112 = vmatpush2.msra.mxu0 0.0
    %113 = vmatprep.subr.mxu0 0.0
    %114 = vmatpush2.msra.mxu0 0.0
    %115 = vmatprep.subr.mxu0 0.0
    %116 = vmatpush2.msra.mxu0 0.0
    %117 = vmatprep.subr.mxu0 0.0
    %118 = vmatpush2.msra.mxu0 0.0
    %119 = vmatprep.subr.mxu0 0.0
    %120 = vmatpush2.msra.mxu0 0.0
    %121 = vmatprep.subr.mxu0 0.0
    %122 = vmatpush2.msra.mxu0 0.0
    %123 = vmatprep.subr.mxu0 0.0
    %124 = vmatpush2.msra.mxu0 0.0
    %125 = vmatprep.subr.mxu0 0.0
    %126 = vmatpush2.msra.mxu0 0.0
    %127 = vmatprep.mubr.f32.mxu0 0.0
    %128 = vmatmul.mubr.f32.gmra.mxu0 %v61
    %v129 = vpop.f32.mrf.mxu0
    %v130 = vadd.f32 0.0, %v129
    %v131 = vpop.f32.mrf.mxu0
    %132 = vdwg.mxu0
    %v133 = vmul.f32 %v130, 14.285714
    %s134 = smul.u32 0, 128
    %v135 = vlaneseq
    %v136 = vand.u32 %v135, 127
    %v137 = vstv %s134
    %v138 = vadd.s32 %v137, %v136
    %vm139 = vcmp.lt.s32.totalorder %v138, 24
    %v140 = vsel %vm139, 1, 0
    %vm141 = vcmp.eq.s32.totalorder %v140, 1
    %v142 = vsel %vm141, %v133, -inf
    // Predicated region
    $region22: #{tpu_custom_call.1} parent=1 // pred_check
      %p143 = pneg %p37
    $region23: #{tpu_custom_call.1} parent=1 // pred_check_branch
      %145 = sbr.rel (%p143) target = $region25
    $region24: #{tpu_custom_call.1} parent=1 // pred_region
      %vm146 = vcmask 7168
      %147 = vst.msk [vmem:[#allocation5] sm:$0xff] %vm146, %v142
    $region25: #{tpu_custom_call.1} parent=1 // pred_fallthru
      _
    %v148 = vld [vmem:[#allocation3] sm:$0xff]
    %149 = vmax.xlane.f32.xlu0 %v142
    %v150 = vpop.xlane.xlu0 %149
    %v151 = vmax.f32 %v148, %v150
    %v152 = vsub.f32 %v148, %v151
    %v153 = vmul.f32 %v152, 1.442695
    %v154 = vpow.pop %v153
    %v155 = vld [vmem:[#allocation4] sm:$0xff]
    %v156 = vmul.f32 %v154, %v155
    %158 = vset.pattern.permute.xlu0 0
    %159 = vperm.xlu0 %158, %v151
    %v160 = vpop.permute.xlu0 %159
    %v162 = vsub.f32 %v142, %v160
    %v163 = vmul.f32 %v162, 1.442695
    %v164 = vpow.pop %v163
    %165 = vadd.xlane.f32.xlu0 %v164
    %v166 = vpop.xlane.xlu0 %165
    %v167 = vadd.f32 %v156, %v166
    %vm168 = vcmask 7168
    %169 = vst.msk [vmem:[#allocation4] sm:$0xff] %vm168, %v167
    %170 = vst.msk [vmem:[#allocation3] sm:$0xff] %vm168, %v151
    // Predicated region
    $region26: #{tpu_custom_call.1} parent=1 // pred_check
      %p171 = pneg %p37
    $region27: #{tpu_custom_call.1} parent=1 // pred_check_branch
      %173 = sbr.rel (%p171) target = $region29
    $region28: #{tpu_custom_call.1} parent=1 // pred_region
      %v174 = vld [vmem:[#allocation3] sm:$0xff]
      %v175 = vld [vmem:[#allocation4] sm:$0xff]
      %v176 = vlog2.pop %v175
      %v177 = vmul.f32 %v176, 0.6931472
      %v178 = vadd.f32 %v174, %v177
      %v179 = vld [vmem:[#allocation5] sm:$0xff]
      %v180 = vsub.f32 %v178, %v179
      %181 = vst.msk [vmem:[%s2] sm:$0xff] %vm168, %v180
    $region29: #{tpu_custom_call.1} parent=1 // pred_fallthru
      _
    // Predicated region
    $region30: #{tpu_custom_call.1} parent=1 // pred_check
      _
    $region31: #{tpu_custom_call.1} parent=1 // pred_check_branch
      %183 = sbr.rel (0) target = $region33
    $region32: #{tpu_custom_call.1} parent=1 // pred_region
      _
    $region33: #{tpu_custom_call.1} parent=1 // pred_fallthru
      _
    // Predicated region
    $region34: #{tpu_custom_call.1} parent=1 // pred_check
      _
    $region35: #{tpu_custom_call.1} parent=1 // pred_check_branch
      %185 = sbr.rel (0) target = $region37
    $region36: #{tpu_custom_call.1} parent=1 // pred_region
      _
    $region37: #{tpu_custom_call.1} parent=1 // pred_fallthru
      _
    %186 = vsyncpa [#allocation7], 1
    %187 = vsyncpa [#allocation9], 1

</llo_original>
